<compile_context>
chip_gen: v7x
topology: tpu7x:2x2x1
jax: 0.10.0
libtpu: 0.0.40
codegen_flags: <defaults>
</compile_context>

<pallas_src>
import functools

import jax
import jax.numpy as jnp
from jax.experimental import pallas as pl
from jax.experimental.pallas import tpu as pltpu

LANE = 128
SUBLANE = 8


def _round_up(n, m):
    return ((n + m - 1) // m) * m


def make_mlp_kernel(n_layers):
    """Fused n-layer MLP on one resident set of weights and one streamed batch tile."""

    def kernel(*refs):
        x_ref = refs[0]
        o_ref = refs[-1]
        h = x_ref[...]
        for li in range(n_layers):
            w_ref = refs[1 + 2 * li]
            b_ref = refs[2 + 2 * li]
            h = jnp.dot(h.astype(w_ref.dtype), w_ref[...],
                        preferred_element_type=jnp.float32)   # MXU, f32 accumulate
            h = h + b_ref[...]                                # bias add in f32
            if li < n_layers - 1:
                h = jnp.maximum(h, 0.0)                       # ReLU in f32 (v5e-safe)
        o_ref[...] = h.astype(o_ref.dtype)

    return kernel


def prepare_params(params, compute_dtype=jnp.bfloat16):
    """One-time prep: weights (in, out) in compute_dtype; biases (1, out) f32.

    params = [(W0, b0), (W1, b1), (W2, b2)] already in (in, out) layout.
    No lane padding: output stays at its natural width (cheaper HBM writeback).
    """
    return [
        (jnp.asarray(w, compute_dtype), jnp.asarray(b, jnp.float32).reshape(1, -1))
        for w, b in params
    ]


def _choose_tiling(batch, tile_b):
    """Pick (n_tiles, tile_rows): tiles divide the padded batch tightly, >=2 tiles
    whenever possible so both TensorCores get work on v7x."""
    n_tiles = max(1, -(-batch // tile_b))          # ceil
    if n_tiles == 1 and batch > SUBLANE:
        n_tiles = 2                                # megacore: give TC1 something to do
    tb = _round_up(-(-batch // n_tiles), SUBLANE)  # multiple of 8 sublanes
    return n_tiles, tb


@functools.partial(jax.jit, static_argnames=("tile_b", "output_split_sizes"))
def mlp_forward(x, prepared_params, *, tile_b=2048, output_split_sizes=None):
    """x: (batch, input_dim). prepared_params from prepare_params()."""
    batch, in_dim = x.shape
    compute_dtype = prepared_params[0][0].dtype
    out_dim = int(prepared_params[-1][0].shape[1])

    x = x.astype(compute_dtype)                    # bf16 I/O halves the x read

    n_tiles, tb = _choose_tiling(batch, int(tile_b))
    padded_batch = n_tiles * tb
    if padded_batch != batch:
        x = jnp.pad(x, ((0, padded_batch - batch), (0, 0)))

    flat_args = [x]
    in_specs = [pl.BlockSpec((tb, in_dim), lambda i: (i, 0))]    # streamed per tile
    for w, b in prepared_params:
        flat_args += [w, b]
        # Constant block index -> DMA'd once, resident across the whole grid.
        # Buffered(1): no second (useless) buffer for the resident weights/biases.
        in_specs += [
            pl.BlockSpec(w.shape, lambda i: (0, 0), pipeline_mode=pl.Buffered(1)),
            pl.BlockSpec(b.shape, lambda i: (0, 0), pipeline_mode=pl.Buffered(1)),
        ]

    # Advisory cost estimate for XLA's scheduler.
    flops = 2 * padded_batch * sum(int(w.shape[0]) * int(w.shape[1])
                                   for w, _ in prepared_params)
    param_bytes = sum(w.size * w.dtype.itemsize + b.size * b.dtype.itemsize
                      for w, b in prepared_params)
    bytes_accessed = (padded_batch * in_dim * x.dtype.itemsize
                      + padded_batch * out_dim * x.dtype.itemsize
                      + param_bytes)

    out = pl.pallas_call(
        make_mlp_kernel(len(prepared_params)),
        out_shape=jax.ShapeDtypeStruct((padded_batch, out_dim), compute_dtype),
        grid=(n_tiles,),
        in_specs=in_specs,
        # Output block last dim == full array dim (no 128-lane padding).
        out_specs=pl.BlockSpec((tb, out_dim), lambda i: (i, 0)),
        compiler_params=pltpu.CompilerParams(
            dimension_semantics=("parallel",),     # megacore sharding on v7x
            vmem_limit_bytes=32 * 1024 * 1024,     # safe everywhere, >> actual use
        ),
        cost_estimate=pl.CostEstimate(
            flops=flops, transcendentals=0, bytes_accessed=bytes_accessed),
    )(*flat_args)

    out = out[:batch]
    if output_split_sizes is not None:             # torch.split(..., dim=-1) equivalent
        split_points, acc = [], 0
        for s in output_split_sizes[:-1]:
            acc += s
            split_points.append(acc)
        return tuple(jnp.split(out, split_points, axis=-1))
    return out


def init_mlp_params(key, input_dim, hidden_dims, output_dim):
    """Deterministic init mimicking nn.Linear default U(-1/sqrt(fan_in), +1/sqrt(fan_in))."""
    dims = [input_dim] + list(hidden_dims) + [output_dim]
    params = []
    for i in range(len(dims) - 1):
        fan_in, fan_out = dims[i], dims[i + 1]
        key, kw, kb = jax.random.split(key, 3)
        bound = 1.0 / (fan_in ** 0.5)
        # Stored directly in (in, out) layout == transpose of PyTorch's (out, in).
        w = jax.random.uniform(kw, (fan_in, fan_out), jnp.float32, -bound, bound)
        b = jax.random.uniform(kb, (fan_out,), jnp.float32, -bound, bound)
        params.append((w, b))
    return params


def mlp_reference(x, params):
    h = x
    n = len(params)
    for i, (w, b) in enumerate(params):
        h = h @ w + b
        if i < n - 1:
            h = jnp.maximum(h, 0.0)
    return h


# TODO(synk): spectral_norm=True applies nn.utils.spectral_norm (a parameter
# reparameterization done outside the forward math); it would be a host-side
# param prep step, not part of this kernel.

if __name__ == "__main__":
    input_dim, hidden_dims, output_dim = 16, [32, 32], 8

    key = jax.random.PRNGKey(0)
    key, kx, kx2 = jax.random.split(key, 3)
    params = init_mlp_params(key, input_dim, hidden_dims, output_dim)

    prepared_f32 = prepare_params(params, compute_dtype=jnp.float32)
    prepared_bf16 = prepare_params(params)                       # default bf16 I/O path

    # f32 path: strict reference check (small batch, single grid step).
    x = jax.random.normal(kx, (8, input_dim), dtype=jnp.float32)
    out = jax.block_until_ready(mlp_forward(x, prepared_f32, tile_b=256))
    ref = mlp_reference(x, params)
    assert out.shape == (8, output_dim)
    assert jnp.allclose(out, ref, atol=1e-5, rtol=1e-5), "mismatch vs reference (batch=8)"

    # f32 path, awkward batch: exercises tight tiling (300 -> 2 tiles of 152, pad=4 rows).
    x2 = jax.random.normal(kx2, (300, input_dim), dtype=jnp.float32)
    out2 = jax.block_until_ready(mlp_forward(x2, prepared_f32, tile_b=256))
    ref2 = mlp_reference(x2, params)
    assert out2.shape == (300, output_dim)
    assert jnp.allclose(out2, ref2, atol=1e-5, rtol=1e-5), "mismatch vs reference (batch=300)"

    # bf16 I/O path (default): half the HBM traffic; looser tolerance vs f32 reference.
    out_bf = jax.block_until_ready(mlp_forward(x2, prepared_bf16, tile_b=256))
    assert out_bf.dtype == jnp.bfloat16 and out_bf.shape == (300, output_dim)
    assert jnp.allclose(out_bf.astype(jnp.float32), ref2, atol=5e-2, rtol=5e-2), \
        "mismatch vs reference (bf16 path)"

    # output_split_sizes option of the module (split along last dim).
    o_a, o_b = mlp_forward(x, prepared_f32, tile_b=256, output_split_sizes=(5, 3))
    assert o_a.shape == (8, 5) and o_b.shape == (8, 3)
    assert jnp.allclose(jnp.concatenate([o_a, o_b], axis=-1), ref, atol=1e-5, rtol=1e-5)

    print("KERNEL_OK")
</pallas_src>

<mosaic_0001>
module attributes {stable_mosaic.version = 11 : i64} {
  func.func @kernel(%arg0: i32, %arg1: memref<8x16xf32, #tpu.memory_space<vmem>>, %arg2: memref<16x32xf32, #tpu.memory_space<vmem>>, %arg3: memref<1x32xf32, #tpu.memory_space<vmem>>, %arg4: memref<32x32xf32, #tpu.memory_space<vmem>>, %arg5: memref<1x32xf32, #tpu.memory_space<vmem>>, %arg6: memref<32x8xf32, #tpu.memory_space<vmem>>, %arg7: memref<1x8xf32, #tpu.memory_space<vmem>>, %arg8: memref<8x8xf32, #tpu.memory_space<vmem>>) attributes {dimension_semantics = [#tpu.dimension_semantics<parallel>], iteration_bounds = array<i64: 1>, scalar_prefetch = 0 : i64, scratch_operands = 0 : i64, tpu.core_type = #tpu.core_type<tc>, window_params = [{transform_indices = @transform_0, window_bounds = array<i64: 8, 16>}, {pipeline_mode = #tpu.pipeline_mode<synchronous>, transform_indices = @transform_1, window_bounds = array<i64: 16, 32>}, {pipeline_mode = #tpu.pipeline_mode<synchronous>, transform_indices = @transform_2, window_bounds = array<i64: 1, 32>}, {pipeline_mode = #tpu.pipeline_mode<synchronous>, transform_indices = @transform_3, window_bounds = array<i64: 32, 32>}, {pipeline_mode = #tpu.pipeline_mode<synchronous>, transform_indices = @transform_4, window_bounds = array<i64: 1, 32>}, {pipeline_mode = #tpu.pipeline_mode<synchronous>, transform_indices = @transform_5, window_bounds = array<i64: 32, 8>}, {pipeline_mode = #tpu.pipeline_mode<synchronous>, transform_indices = @transform_6, window_bounds = array<i64: 1, 8>}, {transform_indices = @transform_7, window_bounds = array<i64: 8, 8>}]} {
    %c0 = arith.constant 0 : index
    %c0_0 = arith.constant 0 : index
    %0 = vector.load %arg1[%c0, %c0_0] : memref<8x16xf32, #tpu.memory_space<vmem>>, vector<8x16xf32>
    %c0_1 = arith.constant 0 : index
    %c0_2 = arith.constant 0 : index
    %1 = vector.load %arg2[%c0_1, %c0_2] : memref<16x32xf32, #tpu.memory_space<vmem>>, vector<16x32xf32>
    %cst = arith.constant dense<0.000000e+00> : vector<8x32xf32>
    %2 = tpu.matmul %0, %1, %cst {dimension_numbers = #tpu.dot_dimension_numbers<[1], [0], [0], [1], [0, 0, 1, 1], [], []>} : vector<8x16xf32>, vector<16x32xf32>, vector<8x32xf32> -> vector<8x32xf32>
    %c0_3 = arith.constant 0 : index
    %c0_4 = arith.constant 0 : index
    %3 = vector.load %arg3[%c0_3, %c0_4] : memref<1x32xf32, #tpu.memory_space<vmem>>, vector<1x32xf32>
    %4 = vector.broadcast %3 : vector<1x32xf32> to vector<8x32xf32>
    %5 = arith.addf %2, %4 : vector<8x32xf32>
    %cst_5 = arith.constant 0.000000e+00 : f32
    %6 = vector.broadcast %cst_5 : f32 to vector<8x32xf32>
    %7 = arith.maximumf %5, %6 : vector<8x32xf32>
    %c0_6 = arith.constant 0 : index
    %c0_7 = arith.constant 0 : index
    %8 = vector.load %arg4[%c0_6, %c0_7] : memref<32x32xf32, #tpu.memory_space<vmem>>, vector<32x32xf32>
    %cst_8 = arith.constant dense<0.000000e+00> : vector<8x32xf32>
    %9 = tpu.matmul %7, %8, %cst_8 {dimension_numbers = #tpu.dot_dimension_numbers<[1], [0], [0], [1], [0, 0, 1, 1], [], []>} : vector<8x32xf32>, vector<32x32xf32>, vector<8x32xf32> -> vector<8x32xf32>
    %c0_9 = arith.constant 0 : index
    %c0_10 = arith.constant 0 : index
    %10 = vector.load %arg5[%c0_9, %c0_10] : memref<1x32xf32, #tpu.memory_space<vmem>>, vector<1x32xf32>
    %11 = vector.broadcast %10 : vector<1x32xf32> to vector<8x32xf32>
    %12 = arith.addf %9, %11 : vector<8x32xf32>
    %cst_11 = arith.constant 0.000000e+00 : f32
    %13 = vector.broadcast %cst_11 : f32 to vector<8x32xf32>
    %14 = arith.maximumf %12, %13 : vector<8x32xf32>
    %c0_12 = arith.constant 0 : index
    %c0_13 = arith.constant 0 : index
    %15 = vector.load %arg6[%c0_12, %c0_13] : memref<32x8xf32, #tpu.memory_space<vmem>>, vector<32x8xf32>
    %cst_14 = arith.constant dense<0.000000e+00> : vector<8x8xf32>
    %16 = tpu.matmul %14, %15, %cst_14 {dimension_numbers = #tpu.dot_dimension_numbers<[1], [0], [0], [1], [0, 0, 1, 1], [], []>} : vector<8x32xf32>, vector<32x8xf32>, vector<8x8xf32> -> vector<8x8xf32>
    %c0_15 = arith.constant 0 : index
    %c0_16 = arith.constant 0 : index
    %17 = vector.load %arg7[%c0_15, %c0_16] : memref<1x8xf32, #tpu.memory_space<vmem>>, vector<1x8xf32>
    %18 = vector.broadcast %17 : vector<1x8xf32> to vector<8x8xf32>
    %19 = arith.addf %16, %18 : vector<8x8xf32>
    %c0_17 = arith.constant 0 : index
    %c0_18 = arith.constant 0 : index
    %20 = vector.load %arg8[%c0_17, %c0_18] : memref<8x8xf32, #tpu.memory_space<vmem>>, vector<8x8xf32>
    tpu.vector_store %arg8[%c0_17, %c0_18], %19 {strides = array<i32>} : memref<8x8xf32, #tpu.memory_space<vmem>>, vector<8x8xf32>,
    return
  }
  func.func @transform_0(%arg0: i32) -> (i32, i32) {
    %c0_i32 = arith.constant 0 : i32
    %c0_i32_0 = arith.constant 0 : i32
    return %arg0, %c0_i32 : i32, i32
  }
  func.func @transform_1(%arg0: i32) -> (i32, i32) {
    %c0_i32 = arith.constant 0 : i32
    %c0_i32_0 = arith.constant 0 : i32
    %c0_i32_1 = arith.constant 0 : i32
    return %c0_i32, %c0_i32_0 : i32, i32
  }
  func.func @transform_2(%arg0: i32) -> (i32, i32) {
    %c0_i32 = arith.constant 0 : i32
    %c0_i32_0 = arith.constant 0 : i32
    %c0_i32_1 = arith.constant 0 : i32
    return %c0_i32, %c0_i32_0 : i32, i32
  }
  func.func @transform_3(%arg0: i32) -> (i32, i32) {
    %c0_i32 = arith.constant 0 : i32
    %c0_i32_0 = arith.constant 0 : i32
    %c0_i32_1 = arith.constant 0 : i32
    return %c0_i32, %c0_i32_0 : i32, i32
  }
  func.func @transform_4(%arg0: i32) -> (i32, i32) {
    %c0_i32 = arith.constant 0 : i32
    %c0_i32_0 = arith.constant 0 : i32
    %c0_i32_1 = arith.constant 0 : i32
    return %c0_i32, %c0_i32_0 : i32, i32
  }
  func.func @transform_5(%arg0: i32) -> (i32, i32) {
    %c0_i32 = arith.constant 0 : i32
    %c0_i32_0 = arith.constant 0 : i32
    %c0_i32_1 = arith.constant 0 : i32
    return %c0_i32, %c0_i32_0 : i32, i32
  }
  func.func @transform_6(%arg0: i32) -> (i32, i32) {
    %c0_i32 = arith.constant 0 : i32
    %c0_i32_0 = arith.constant 0 : i32
    %c0_i32_1 = arith.constant 0 : i32
    return %c0_i32, %c0_i32_0 : i32, i32
  }
  func.func @transform_7(%arg0: i32) -> (i32, i32) {
    %c0_i32 = arith.constant 0 : i32
    %c0_i32_0 = arith.constant 0 : i32
    return %arg0, %c0_i32 : i32, i32
  }
}

</mosaic_0001>

<llo_original>
// kernel: mlp_forward.1
$region0: #{mlp_forward.1}
  #allocation0 [shape = 'u32[]', space=smem, size = 0x4, offset = 0x4, fixed_abs, tag = 'smem constant byte address 0x4 - core index']
  #allocation1 [shape = 'u32[144,128]{1,0:T(1,128)}', space=vmem, size = 0x12000, scoped, tag = 'internal scratch']
  %s0 = inlined_call_operand.hbm [shape: f32[8,16], index: 0, kind: input, shape index: {}]
  %s1 = inlined_call_operand.vmem [shape: f32[16,32], index: 1, kind: input, shape index: {}]
  %s2 = inlined_call_operand.vmem [shape: f32[1,32], index: 2, kind: input, shape index: {}]
  %s3 = inlined_call_operand.vmem [shape: f32[32,32], index: 3, kind: input, shape index: {}]
  %s4 = inlined_call_operand.vmem [shape: f32[1,32], index: 4, kind: input, shape index: {}]
  %s5 = inlined_call_operand.vmem [shape: f32[32,8], index: 5, kind: input, shape index: {}]
  %s6 = inlined_call_operand.vmem [shape: f32[1,8], index: 6, kind: input, shape index: {}]
  %s7 = inlined_call_operand.hbm [shape: f32[8,8], index: 7, kind: output, shape index: {}]
  %s8 = sld [smem:[#allocation0]]
  $region42: #{mlp_forward.1} parent=0
    _
  %s10 = ssub.s32 1, %s8
  %s11 = scalar_select 0, %s10, %s8
  $region1: #{mlp_forward.1} parent=0
    #allocation2 [shape = 'u8[4096]{0}', space=vmem, size = 0x1000, scoped, tag = 'input window, operand 0, single buffered']
    #allocation3 [shape = 's32[1]{0}', space=sflag, size = 0x4, scoped, tag = 'scoped memory for mlp_forward.1']
    #allocation4 [shape = 's32[1]{0}', space=sflag, size = 0x4, scoped, tag = 'scoped memory for mlp_forward.1']
    #allocation5 [shape = 'u8[4096]{0}', space=vmem, size = 0x1000, scoped, tag = 'output window, operand 0, single buffered']
    %12 = vsyncpa [#allocation3], 0
    %13 = vsyncpa [#allocation4], 0
    // Predicated region
    $region2: #{mlp_forward.1} parent=1 // pred_check
      _
    $region3: #{mlp_forward.1} parent=1 // pred_check_branch
      %15 = sbr.rel (0) target = $region5
    $region4: #{mlp_forward.1} parent=1 // pred_region
      %s17 = ssub.s32 128, 128
      %18 = vsyncadd [#allocation3], %s17
      %s20 = sshll.u32 [#allocation2], 4
      %s21 = int_to_ptr.vmem [resolvable:$true] %s20
      %23 = dma.hbm_to_vmem [thread:$0]  %s0, 128, %s21, [#allocation3]
    $region5: #{mlp_forward.1} parent=1 // pred_fallthru
      _
    // Predicated region
    $region6: #{mlp_forward.1} parent=1 // pred_check
      _
    $region7: #{mlp_forward.1} parent=1 // pred_check_branch
      %25 = sbr.rel (0) target = $region9
    $region8: #{mlp_forward.1} parent=1 // pred_region
      _
    $region9: #{mlp_forward.1} parent=1 // pred_fallthru
      _
    // Predicated region
    $region10: #{mlp_forward.1} parent=1 // pred_check
      _
    $region11: #{mlp_forward.1} parent=1 // pred_check_branch
      %27 = sbr.rel (0) target = $region13
    $region12: #{mlp_forward.1} parent=1 // pred_region
      _
    $region13: #{mlp_forward.1} parent=1 // pred_fallthru
      _
    // Predicated region
    $region14: #{mlp_forward.1} parent=1 // pred_check
      _
    $region15: #{mlp_forward.1} parent=1 // pred_check_branch
      %29 = sbr.rel (0) target = $region17
    $region16: #{mlp_forward.1} parent=1 // pred_region
      _
    $region17: #{mlp_forward.1} parent=1 // pred_fallthru
      _
    // Predicated region
    $region18: #{mlp_forward.1} parent=1 // pred_check
      _
    $region19: #{mlp_forward.1} parent=1 // pred_check_branch
      %31 = sbr.rel (0) target = $region21
    $region20: #{mlp_forward.1} parent=1 // pred_region
      _
    $region21: #{mlp_forward.1} parent=1 // pred_fallthru
      _
    // Predicated region
    $region22: #{mlp_forward.1} parent=1 // pred_check
      _
    $region23: #{mlp_forward.1} parent=1 // pred_check_branch
      %33 = sbr.rel (0) target = $region25
    $region24: #{mlp_forward.1} parent=1 // pred_region
      _
    $region25: #{mlp_forward.1} parent=1 // pred_fallthru
      _
    // Predicated region
    $region26: #{mlp_forward.1} parent=1 // pred_check
      _
    $region27: #{mlp_forward.1} parent=1 // pred_check_branch
      %35 = sbr.rel (0) target = $region29
    $region28: #{mlp_forward.1} parent=1 // pred_region
      _
    $region29: #{mlp_forward.1} parent=1 // pred_fallthru
      _
    // Predicated region
    $region30: #{mlp_forward.1} parent=1 // pred_check
      _
    $region31: #{mlp_forward.1} parent=1 // pred_check_branch
      %37 = sbr.rel (0) target = $region33
    $region32: #{mlp_forward.1} parent=1 // pred_region
      %38 = dma.done [#allocation3], 128
    $region33: #{mlp_forward.1} parent=1 // pred_fallthru
      _
    %v39 = vld [vmem:[#allocation2] sm:$0xff]
    %v40 = vld [vmem:[%s1] sm:$0xff]
    %v41 = vld [vmem:[%s1 + $0x8] sm:$0xff]
    %v42 = vld [vmem:[%s2] sm:$0x1]
    %v44 = vlaneseq
    %v45 = vshrl.u32 %v44, 7
    %v46 = vsub.s32 0, %v45
    %v47 = vrot.slane %v42, %v46
    %vm49 = vcmask 130048
    %v51 = vsel %vm49, %v39, 0
    %53 = vmatprep.subr.mxu0 0.0
    %54 = vmatpush1.msra.mxu0 %v40
    %55 = vmatprep.subr.mxu0 0.0
    %56 = vmatpush1.msra.mxu0 %v41
    %57 = vmatprep.subr.mxu0 0.0
    %58 = vmatpush1.msra.mxu0 0.0
    %59 = vmatprep.subr.mxu0 0.0
    %60 = vmatpush1.msra.mxu0 0.0
    %61 = vmatprep.subr.mxu0 0.0
    %62 = vmatpush1.msra.mxu0 0.0
    %63 = vmatprep.subr.mxu0 0.0
    %64 = vmatpush1.msra.mxu0 0.0
    %65 = vmatprep.subr.mxu0 0.0
    %66 = vmatpush1.msra.mxu0 0.0
    %67 = vmatprep.subr.mxu0 0.0
    %68 = vmatpush1.msra.mxu0 0.0
    %69 = vmatprep.subr.mxu0 0.0
    %70 = vmatpush1.msra.mxu0 0.0
    %71 = vmatprep.subr.mxu0 0.0
    %72 = vmatpush1.msra.mxu0 0.0
    %73 = vmatprep.subr.mxu0 0.0
    %74 = vmatpush1.msra.mxu0 0.0
    %75 = vmatprep.subr.mxu0 0.0
    %76 = vmatpush1.msra.mxu0 0.0
    %77 = vmatprep.subr.mxu0 0.0
    %78 = vmatpush1.msra.mxu0 0.0
    %79 = vmatprep.subr.mxu0 0.0
    %80 = vmatpush1.msra.mxu0 0.0
    %81 = vmatprep.subr.mxu0 0.0
    %82 = vmatpush1.msra.mxu0 0.0
    %83 = vmatprep.subr.mxu0 0.0
    %84 = vmatpush1.msra.mxu0 0.0
    %85 = vmatprep.subr.mxu0 0.0
    %86 = vmatpush1.msra.mxu0 0.0
    %87 = vmatprep.subr.mxu0 0.0
    %88 = vmatpush1.msra.mxu0 0.0
    %89 = vmatprep.subr.mxu0 0.0
    %90 = vmatpush1.msra.mxu0 0.0
    %91 = vmatprep.subr.mxu0 0.0
    %92 = vmatpush1.msra.mxu0 0.0
    %93 = vmatprep.subr.mxu0 0.0
    %94 = vmatpush1.msra.mxu0 0.0
    %95 = vmatprep.subr.mxu0 0.0
    %96 = vmatpush1.msra.mxu0 0.0
    %97 = vmatprep.subr.mxu0 0.0
    %98 = vmatpush1.msra.mxu0 0.0
    %99 = vmatprep.subr.mxu0 0.0
    %100 = vmatpush1.msra.mxu0 0.0
    %101 = vmatprep.subr.mxu0 0.0
    %102 = vmatpush1.msra.mxu0 0.0
    %103 = vmatprep.subr.mxu0 0.0
    %104 = vmatpush1.msra.mxu0 0.0
    %105 = vmatprep.subr.mxu0 0.0
    %106 = vmatpush1.msra.mxu0 0.0
    %107 = vmatprep.subr.mxu0 0.0
    %108 = vmatpush1.msra.mxu0 0.0
    %109 = vmatprep.subr.mxu0 0.0
    %110 = vmatpush1.msra.mxu0 0.0
    %111 = vmatprep.subr.mxu0 0.0
    %112 = vmatpush1.msra.mxu0 0.0
    %113 = vmatprep.subr.mxu0 0.0
    %114 = vmatpush1.msra.mxu0 0.0
    %115 = vmatprep.subr.mxu0 0.0
    %116 = vmatpush1.msra.mxu0 0.0
    %117 = vmatprep.mubr.f32.mxu0 0.0
    %118 = vmatmul.mubr.f32.gmra.mrb[0].mxu0 %v51
    %v119 = vpop.f32.mrb[0].mxu0
    %v120 = vadd.f32 %v47, %v119
    %v121 = vpop.f32.mrb[0].mxu0
    %122 = vdwg.mxu0
    %v123 = vmax.f32 %v120, 0.0
    %v124 = vld [vmem:[%s3] sm:$0xff]
    %v125 = vld [vmem:[%s3 + $0x8] sm:$0xff]
    %v126 = vld [vmem:[%s3 + $0x10] sm:$0xff]
    %v127 = vld [vmem:[%s3 + $0x18] sm:$0xff]
    %v128 = vld [vmem:[%s4] sm:$0x1]
    %v130 = vlaneseq
    %v131 = vshrl.u32 %v130, 7
    %v132 = vsub.s32 0, %v131
    %v133 = vrot.slane %v128, %v132
    %vm135 = vcmask 261120
    %v137 = vsel %vm135, %v123, 0
    %139 = vmatprep.subr.mxu0 0.0
    %140 = vmatpush1.msra.mxu0 %v124
    %141 = vmatprep.subr.mxu0 0.0
    %142 = vmatpush1.msra.mxu0 %v125
    %143 = vmatprep.subr.mxu0 0.0
    %144 = vmatpush1.msra.mxu0 %v126
    %145 = vmatprep.subr.mxu0 0.0
    %146 = vmatpush1.msra.mxu0 %v127
    %147 = vmatprep.subr.mxu0 0.0
    %148 = vmatpush1.msra.mxu0 0.0
    %149 = vmatprep.subr.mxu0 0.0
    %150 = vmatpush1.msra.mxu0 0.0
    %151 = vmatprep.subr.mxu0 0.0
    %152 = vmatpush1.msra.mxu0 0.0
    %153 = vmatprep.subr.mxu0 0.0
    %154 = vmatpush1.msra.mxu0 0.0
    %155 = vmatprep.subr.mxu0 0.0
    %156 = vmatpush1.msra.mxu0 0.0
    %157 = vmatprep.subr.mxu0 0.0
    %158 = vmatpush1.msra.mxu0 0.0
    %159 = vmatprep.subr.mxu0 0.0
    %160 = vmatpush1.msra.mxu0 0.0
    %161 = vmatprep.subr.mxu0 0.0
    %162 = vmatpush1.msra.mxu0 0.0
    %163 = vmatprep.subr.mxu0 0.0
    %164 = vmatpush1.msra.mxu0 0.0
    %165 = vmatprep.subr.mxu0 0.0
    %166 = vmatpush1.msra.mxu0 0.0
    %167 = vmatprep.subr.mxu0 0.0
    %168 = vmatpush1.msra.mxu0 0.0
    %169 = vmatprep.subr.mxu0 0.0
    %170 = vmatpush1.msra.mxu0 0.0
    %171 = vmatprep.subr.mxu0 0.0
    %172 = vmatpush1.msra.mxu0 0.0
    %173 = vmatprep.subr.mxu0 0.0
    %174 = vmatpush1.msra.mxu0 0.0
    %175 = vmatprep.subr.mxu0 0.0
    %176 = vmatpush1.msra.mxu0 0.0
    %177 = vmatprep.subr.mxu0 0.0
    %178 = vmatpush1.msra.mxu0 0.0
    %179 = vmatprep.subr.mxu0 0.0
    %180 = vmatpush1.msra.mxu0 0.0
    %181 = vmatprep.subr.mxu0 0.0
    %182 = vmatpush1.msra.mxu0 0.0
    %183 = vmatprep.subr.mxu0 0.0
    %184 = vmatpush1.msra.mxu0 0.0
    %185 = vmatprep.subr.mxu0 0.0
    %186 = vmatpush1.msra.mxu0 0.0
    %187 = vmatprep.subr.mxu0 0.0
    %188 = vmatpush1.msra.mxu0 0.0
    %189 = vmatprep.subr.mxu0 0.0
    %190 = vmatpush1.msra.mxu0 0.0
    %191 = vmatprep.subr.mxu0 0.0
    %192 = vmatpush1.msra.mxu0 0.0
    %193 = vmatprep.subr.mxu0 0.0
    %194 = vmatpush1.msra.mxu0 0.0
    %195 = vmatprep.subr.mxu0 0.0
    %196 = vmatpush1.msra.mxu0 0.0
    %197 = vmatprep.subr.mxu0 0.0
    %198 = vmatpush1.msra.mxu0 0.0
    %199 = vmatprep.subr.mxu0 0.0
    %200 = vmatpush1.msra.mxu0 0.0
    %201 = vmatprep.subr.mxu0 0.0
    %202 = vmatpush1.msra.mxu0 0.0
    %203 = vmatprep.mubr.f32.mxu0 0.0
    %204 = vmatmul.mubr.f32.gmra.mrb[0].mxu0 %v137
    %v205 = vpop.f32.mrb[0].mxu0
    %v206 = vadd.f32 %v133, %v205
    %v207 = vpop.f32.mrb[0].mxu0
    %208 = vdwg.mxu0
    %v209 = vmax.f32 %v206, 0.0
    %v210 = vld [vmem:[%s5] sm:$0xff]
    %v211 = vld [vmem:[%s5 + $0x8] sm:$0xff]
    %v212 = vld [vmem:[%s5 + $0x10] sm:$0xff]
    %v213 = vld [vmem:[%s5 + $0x18] sm:$0xff]
    %v214 = vld [vmem:[%s6] sm:$0x1]
    %v216 = vlaneseq
    %v217 = vshrl.u32 %v216, 7
    %v218 = vsub.s32 0, %v217
    %v219 = vrot.slane %v214, %v218
    %v222 = vsel %vm135, %v209, 0
    %224 = vmatprep.subr.mxu0 0.0
    %225 = vmatpush1.msra.mxu0 %v210
    %226 = vmatprep.subr.mxu0 0.0
    %227 = vmatpush1.msra.mxu0 %v211
    %228 = vmatprep.subr.mxu0 0.0
    %229 = vmatpush1.msra.mxu0 %v212
    %230 = vmatprep.subr.mxu0 0.0
    %231 = vmatpush1.msra.mxu0 %v213
    %232 = vmatprep.subr.mxu0 0.0
    %233 = vmatpush1.msra.mxu0 0.0
    %234 = vmatprep.subr.mxu0 0.0
    %235 = vmatpush1.msra.mxu0 0.0
    %236 = vmatprep.subr.mxu0 0.0
    %237 = vmatpush1.msra.mxu0 0.0
    %238 = vmatprep.subr.mxu0 0.0
    %239 = vmatpush1.msra.mxu0 0.0
    %240 = vmatprep.subr.mxu0 0.0
    %241 = vmatpush1.msra.mxu0 0.0
    %242 = vmatprep.subr.mxu0 0.0
    %243 = vmatpush1.msra.mxu0 0.0
    %244 = vmatprep.subr.mxu0 0.0
    %245 = vmatpush1.msra.mxu0 0.0
    %246 = vmatprep.subr.mxu0 0.0
    %247 = vmatpush1.msra.mxu0 0.0
    %248 = vmatprep.subr.mxu0 0.0
    %249 = vmatpush1.msra.mxu0 0.0
    %250 = vmatprep.subr.mxu0 0.0
    %251 = vmatpush1.msra.mxu0 0.0
    %252 = vmatprep.subr.mxu0 0.0
    %253 = vmatpush1.msra.mxu0 0.0
    %254 = vmatprep.subr.mxu0 0.0
    %255 = vmatpush1.msra.mxu0 0.0
    %256 = vmatprep.subr.mxu0 0.0
    %257 = vmatpush1.msra.mxu0 0.0
    %258 = vmatprep.subr.mxu0 0.0
    %259 = vmatpush1.msra.mxu0 0.0
    %260 = vmatprep.subr.mxu0 0.0
    %261 = vmatpush1.msra.mxu0 0.0
    %262 = vmatprep.subr.mxu0 0.0
    %263 = vmatpush1.msra.mxu0 0.0
    %264 = vmatprep.subr.mxu0 0.0
    %265 = vmatpush1.msra.mxu0 0.0
    %266 = vmatprep.subr.mxu0 0.0
    %267 = vmatpush1.msra.mxu0 0.0
    %268 = vmatprep.subr.mxu0 0.0
    %269 = vmatpush1.msra.mxu0 0.0
    %270 = vmatprep.subr.mxu0 0.0
    %271 = vmatpush1.msra.mxu0 0.0
    %272 = vmatprep.subr.mxu0 0.0
    %273 = vmatpush1.msra.mxu0 0.0
    %274 = vmatprep.subr.mxu0 0.0
    %275 = vmatpush1.msra.mxu0 0.0
    %276 = vmatprep.subr.mxu0 0.0
    %277 = vmatpush1.msra.mxu0 0.0
    %278 = vmatprep.subr.mxu0 0.0
    %279 = vmatpush1.msra.mxu0 0.0
    %280 = vmatprep.subr.mxu0 0.0
    %281 = vmatpush1.msra.mxu0 0.0
    %282 = vmatprep.subr.mxu0 0.0
    %283 = vmatpush1.msra.mxu0 0.0
    %284 = vmatprep.subr.mxu0 0.0
    %285 = vmatpush1.msra.mxu0 0.0
    %286 = vmatprep.subr.mxu0 0.0
    %287 = vmatpush1.msra.mxu0 0.0
    %288 = vmatprep.mubr.f32.mxu0 0.0
    %289 = vmatmul.mubr.f32.gmra.mrb[0].mxu0 %v222
    %v290 = vpop.f32.mrb[0].mxu0
    %v291 = vadd.f32 %v219, %v290
    %v292 = vpop.f32.mrb[0].mxu0
    %293 = vdwg.mxu0
    %vm294 = vcmask 64512
    %295 = vst.msk [vmem:[#allocation5] sm:$0xff] %vm294, %v291
    // Predicated region
    $region34: #{mlp_forward.1} parent=1 // pred_check
      _
    $region35: #{mlp_forward.1} parent=1 // pred_check_branch
      %297 = sbr.rel (0) target = $region37
    $region36: #{mlp_forward.1} parent=1 // pred_region
      %s299 = ssub.s32 128, 128
      %300 = vsyncadd [#allocation4], %s299
      %s302 = sshll.u32 [#allocation5], 4
      %s303 = int_to_ptr.vmem [resolvable:$true] %s302
      %305 = dma.vmem_to_hbm [thread:$0]  %s303, 128, %s7, [#allocation4]
    $region37: #{mlp_forward.1} parent=1 // pred_fallthru
      _
    // Predicated region
    $region38: #{mlp_forward.1} parent=1 // pred_check
      _
    $region39: #{mlp_forward.1} parent=1 // pred_check_branch
      %307 = sbr.rel (0) target = $region41
    $region40: #{mlp_forward.1} parent=1 // pred_region
      %308 = dma.done [#allocation4], 128
    $region41: #{mlp_forward.1} parent=1 // pred_fallthru
      _
    %309 = vsyncpa [#allocation3], 1
    %310 = vsyncpa [#allocation4], 1

</llo_original>
